<compile_context>
chip_gen: v6e
topology: v6e:2x2x1
jax: 0.10.0
libtpu: 0.0.40
codegen_flags: <defaults>
</compile_context>

<pallas_src>
import jax
import jax.numpy as jnp
from jax.experimental import pallas as pl
from jax.experimental.pallas import tpu as pltpu


def _mlp_kernel(xi_ref, w0T_ref, b0_ref, w1T_ref, b1_ref, w2d_ref, b2d_ref, o_ref):
    # xi_ref: (1, L) lane-dense, feature-interleaved: lane 2i -> x_i[0], lane 2i+1 -> x_i[1].
    a = xi_ref[...]                                            # (1, L)

    lane = jax.lax.broadcasted_iota(jnp.int32, a.shape, 1)
    even = (lane % 2) == 0                                     # lane parity (block offset is even)

    # Neighbour lanes via static rolls (concat of static slices; cheap, XLU/VPU are idle).
    nxt = jnp.roll(a, -1, axis=1)                              # nxt[j] = a[j+1]
    prv = jnp.roll(a, 1, axis=1)                               # prv[j] = a[j-1]
    # Wrap-around lanes are never selected: even lanes use `nxt`, odd lanes use `prv`,
    # so every valid lane only ever reads its own 2-lane sample pair.
    x0 = jnp.where(even, a, prv)                               # feature 0 of this lane's sample
    x1 = jnp.where(even, nxt, a)                               # feature 1 of this lane's sample

    # linear_0 (contraction depth 2) as two broadcast FMAs on the VPU, then ReLU.
    w0T = w0T_ref[...]                                         # (H0, 2)
    h0 = w0T[:, 0:1] * x0 + w0T[:, 1:2] * x1 + b0_ref[...]     # (H0, L)
    h0 = jnp.maximum(h0, 0.0)

    # linear_1 on the MXU (f32 acc), then Sigmoid via tanh (1 EUP op; no exp overflow,
    # no approx-reciprocal error).  bf16 operands would help on v6e/v7x but not v5e; skipped.
    z1 = jnp.dot(w1T_ref[...], h0, preferred_element_type=jnp.float32) + b1_ref[...]
    h1 = 0.5 * jnp.tanh(0.5 * z1) + 0.5                        # (H1, L)

    # linear_2 + 2-class Softmax == sigmoid(logit_0 - logit_1), again via tanh.
    d = jnp.dot(w2d_ref[...], h1, preferred_element_type=jnp.float32) + b2d_ref[...]  # (1, L)
    p0 = 0.5 * jnp.tanh(0.5 * d) + 0.5

    # Single lane-dense store, already in the native interleaved (B, 2) layout:
    # even lane -> P(class 0), odd lane -> P(class 1) = 1 - P(class 0).
    o_ref[...] = jnp.where(even, p0, 1.0 - p0).astype(o_ref.dtype)


def _choose_tile(B, tb=None, tb_max=16384):
    """Pick the per-step batch tile (samples) and the grid length."""
    if tb is not None:
        if tb >= B:
            return B, 1
        assert tb % 64 == 0, "explicit tile must keep the lane block a multiple of 128"
        return tb, pl.cdiv(B, tb)
    if B <= 2048:
        return B, 1                                            # single full-extent block
    # even number of tiles (>= 4): balanced across v7x's 2 TCs, enough steps for pipelining,
    # and each step still moves/computes a large slab (tile capped by the VMEM budget).
    ntiles = max(4, 2 * pl.cdiv(pl.cdiv(B, tb_max), 2))
    tb_eff = pl.cdiv(pl.cdiv(B, ntiles), 128) * 128            # 128-lane multiple (256 flat lanes)
    return tb_eff, pl.cdiv(B, tb_eff)


def relu_sig_network(x, params, *, tb=None):
    """Forward pass of ReLUSigNetwork as a single fused Pallas kernel.

    x: [B, 2] float32
    params: dict with w0 [2,H0], b0 [1,H0], w1 [H0,H1], b1 [1,H1], w2 [H1,2], b2 [1,2]
    returns: [B, 2] float32 softmax probabilities
    """
    B, Din = x.shape
    w0, b0 = params["w0"], params["b0"]
    w1, b1 = params["w1"], params["b1"]
    w2, b2 = params["w2"], params["b2"]
    H0, H1, Dout = w0.shape[1], w1.shape[1], w2.shape[1]
    assert Din == 2 and Dout == 2, "ReLUSigNetwork is a 2-in / 2-class model"

    # Free bitcast views / tiny weight reshapes only -- no activation-sized HBM copies.
    xf = x.reshape(1, 2 * B)                                   # native interleaved storage, lane-dense
    w0T = w0.T                                                 # (H0, 2)
    b0c = b0.T                                                 # (H0, 1)
    w1T = w1.T                                                 # (H1, H0)
    b1c = b1.T                                                 # (H1, 1)
    w2d = (w2[:, 0] - w2[:, 1]).reshape(1, H1)                 # fused 2-class weight difference
    b2d = (b2.reshape(-1)[0] - b2.reshape(-1)[1]).reshape(1, 1)

    tb_eff, grid_n = _choose_tile(B, tb)
    lane_blk = 2 * tb_eff                                      # flat lanes per grid step

    def const(shape):
        return pl.BlockSpec(shape, lambda i: (0, 0))           # VMEM-resident across all tiles

    of = pl.pallas_call(
        _mlp_kernel,
        out_shape=jax.ShapeDtypeStruct((1, 2 * B), jnp.float32),
        grid_spec=pltpu.PrefetchScalarGridSpec(
            num_scalar_prefetch=0,
            grid=(grid_n,),                                    # ragged final block is masked by Pallas
            in_specs=[
                pl.BlockSpec((1, lane_blk), lambda i: (0, i)), # streamed interleaved x slab
                const((H0, Din)), const((H0, 1)),
                const((H1, H0)), const((H1, 1)),
                const((1, H1)), const((1, 1)),
            ],
            out_specs=pl.BlockSpec((1, lane_blk), lambda i: (0, i)),
        ),
        compiler_params=pltpu.CompilerParams(
            dimension_semantics=("parallel",),                 # shard batch tiles across TCs on v7x
            vmem_limit_bytes=32 * 1024 * 1024),                # headroom for the (H, 2*tb) intermediates
    )(xf, w0T, b0c, w1T, b1c, w2d, b2d)

    return of.reshape(B, 2)                                    # free bitcast back to (B, 2)


def init_params(key, hidden_size0, hidden_size1):
    """Deterministic init matching the homework LinearLayer shapes:
    weight [in, out], bias kept as [1, out] for TPU 2-D layout."""
    ks = jax.random.split(key, 6)

    def uniform(k, shape, fan_in):
        bound = 1.0 / jnp.sqrt(fan_in)
        return jax.random.uniform(k, shape, jnp.float32, -bound, bound)

    return {
        "w0": uniform(ks[0], (2, hidden_size0), 2.0),
        "b0": uniform(ks[1], (1, hidden_size0), 2.0),
        "w1": uniform(ks[2], (hidden_size0, hidden_size1), float(hidden_size0)),
        "b1": uniform(ks[3], (1, hidden_size1), float(hidden_size0)),
        "w2": uniform(ks[4], (hidden_size1, 2), float(hidden_size1)),
        "b2": uniform(ks[5], (1, 2), float(hidden_size1)),
    }


def reference_forward(x, p):
    hp = jax.lax.Precision.HIGHEST
    h0 = jnp.maximum(jnp.dot(x, p["w0"], precision=hp) + p["b0"], 0.0)
    h1 = jax.nn.sigmoid(jnp.dot(h0, p["w1"], precision=hp) + p["b1"])
    return jax.nn.softmax(jnp.dot(h1, p["w2"], precision=hp) + p["b2"], axis=-1)


if __name__ == "__main__":
    key = jax.random.PRNGKey(0)
    k_x1, k_x2, k_p = jax.random.split(key, 3)

    H0, H1 = 32, 32
    params = init_params(k_p, H0, H1)

    # Small batch -> single full-extent block (grid = 1).
    B1 = 200
    x1 = jax.random.normal(k_x1, (B1, 2), jnp.float32)
    out1 = jax.block_until_ready(relu_sig_network(x1, params))
    ref1 = reference_forward(x1, params)
    assert out1.shape == (B1, 2)
    assert jnp.allclose(out1, ref1, atol=1e-3, rtol=1e-3), "mismatch vs reference (small batch)"
    assert jnp.allclose(jnp.sum(out1, axis=-1), jnp.ones((B1,)), atol=1e-5)

    # Larger batch -> tiled path: grid = 4 (even), ragged final block (3000 = 3*768 + 696).
    B2 = 3000
    x2 = jax.random.normal(k_x2, (B2, 2), jnp.float32)
    out2 = jax.block_until_ready(relu_sig_network(x2, params))
    ref2 = reference_forward(x2, params)
    assert out2.shape == (B2, 2)
    assert jnp.allclose(out2, ref2, atol=1e-3, rtol=1e-3), "mismatch vs reference (tiled batch)"
    assert jnp.allclose(jnp.sum(out2, axis=-1), jnp.ones((B2,)), atol=1e-5)

    print("KERNEL_OK")
</pallas_src>

<mosaic_0001>
module attributes {stable_mosaic.version = 11 : i64} {
  func.func @_mlp_kernel(%arg0: i32, %arg1: memref<1x400xf32, #tpu.memory_space<vmem>>, %arg2: memref<32x2xf32, #tpu.memory_space<vmem>>, %arg3: memref<32x1xf32, #tpu.memory_space<vmem>>, %arg4: memref<32x32xf32, #tpu.memory_space<vmem>>, %arg5: memref<32x1xf32, #tpu.memory_space<vmem>>, %arg6: memref<1x32xf32, #tpu.memory_space<vmem>>, %arg7: memref<1x1xf32, #tpu.memory_space<vmem>>, %arg8: memref<1x400xf32, #tpu.memory_space<vmem>>) attributes {dimension_semantics = [#tpu.dimension_semantics<parallel>], iteration_bounds = array<i64: 1>, scalar_prefetch = 0 : i64, scratch_operands = 0 : i64, tpu.core_type = #tpu.core_type<tc>, window_params = [{transform_indices = @transform_0, window_bounds = array<i64: 1, 400>}, {pipeline_mode = #tpu.pipeline_mode<synchronous>, transform_indices = @transform_1, window_bounds = array<i64: 32, 2>}, {pipeline_mode = #tpu.pipeline_mode<synchronous>, transform_indices = @transform_2, window_bounds = array<i64: 32, 1>}, {pipeline_mode = #tpu.pipeline_mode<synchronous>, transform_indices = @transform_3, window_bounds = array<i64: 32, 32>}, {pipeline_mode = #tpu.pipeline_mode<synchronous>, transform_indices = @transform_4, window_bounds = array<i64: 32, 1>}, {pipeline_mode = #tpu.pipeline_mode<synchronous>, transform_indices = @transform_5, window_bounds = array<i64: 1, 32>}, {pipeline_mode = #tpu.pipeline_mode<synchronous>, transform_indices = @transform_6, window_bounds = array<i64: 1, 1>}, {transform_indices = @transform_7, window_bounds = array<i64: 1, 400>}]} {
    %c0 = arith.constant 0 : index
    %c0_0 = arith.constant 0 : index
    %0 = vector.load %arg1[%c0, %c0_0] : memref<1x400xf32, #tpu.memory_space<vmem>>, vector<1x400xf32>
    %1 = tpu.iota {dimensions = array<i32: 1>} : vector<1x400xi32>
    %c2_i32 = arith.constant 2 : i32
    %c0_i32 = arith.constant 0 : i32
    %2 = arith.cmpi eq, %c2_i32, %c0_i32 : i32
    %c1_i32 = arith.constant 1 : i32
    %3 = arith.select %2, %c1_i32, %c2_i32 : i32
    %4 = vector.broadcast %3 : i32 to vector<1x400xi32>
    %5 = arith.remsi %1, %4 : vector<1x400xi32>
    %c0_i32_1 = arith.constant 0 : i32
    %6 = vector.broadcast %c0_i32_1 : i32 to vector<1x400xi32>
    %7 = arith.cmpi ne, %5, %6 : vector<1x400xi32>
    %c0_i32_2 = arith.constant 0 : i32
    %8 = vector.broadcast %c0_i32_2 : i32 to vector<1x400xi32>
    %9 = arith.cmpi slt, %5, %8 : vector<1x400xi32>
    %c0_i32_3 = arith.constant 0 : i32
    %10 = arith.cmpi slt, %3, %c0_i32_3 : i32
    %11 = vector.broadcast %10 : i1 to vector<1x400xi1>
    %12 = vector.broadcast %11 : vector<1x400xi1> to vector<1x400xi1>
    %13 = arith.xori %9, %12 : vector<1x400xi1>
    %14 = arith.andi %13, %7 : vector<1x400xi1>
    %15 = vector.broadcast %3 : i32 to vector<1x400xi32>
    %16 = arith.addi %5, %15 : vector<1x400xi32>
    %17 = arith.select %14, %16, %5 : vector<1x400xi1>, vector<1x400xi32>
    %c0_i32_4 = arith.constant 0 : i32
    %18 = vector.broadcast %c0_i32_4 : i32 to vector<1x400xi32>
    %19 = arith.cmpi eq, %17, %18 : vector<1x400xi32>
    %20 = vector.extract_strided_slice %0 {offsets = [0, 1], sizes = [1, 399], strides = [1, 1]} : vector<1x400xf32> to vector<1x399xf32>
    %21 = vector.extract_strided_slice %0 {offsets = [0, 0], sizes = [1, 1], strides = [1, 1]} : vector<1x400xf32> to vector<1x1xf32>
    %22 = tpu.concatenate %20, %21 in 1 : vector<1x399xf32>, vector<1x1xf32> -> vector<1x400xf32>
    %23 = vector.extract_strided_slice %0 {offsets = [0, 399], sizes = [1, 1], strides = [1, 1]} : vector<1x400xf32> to vector<1x1xf32>
    %24 = vector.extract_strided_slice %0 {offsets = [0, 0], sizes = [1, 399], strides = [1, 1]} : vector<1x400xf32> to vector<1x399xf32>
    %25 = tpu.concatenate %23, %24 in 1 : vector<1x1xf32>, vector<1x399xf32> -> vector<1x400xf32>
    %26 = arith.select %19, %0, %25 : vector<1x400xi1>, vector<1x400xf32>
    %27 = arith.select %19, %22, %0 : vector<1x400xi1>, vector<1x400xf32>
    %c0_5 = arith.constant 0 : index
    %c0_6 = arith.constant 0 : index
    %28 = vector.load %arg2[%c0_5, %c0_6] : memref<32x2xf32, #tpu.memory_space<vmem>>, vector<32x2xf32>
    %29 = vector.extract_strided_slice %28 {offsets = [0, 0], sizes = [32, 1], strides = [1, 1]} : vector<32x2xf32> to vector<32x1xf32>
    %30 = vector.broadcast %29 : vector<32x1xf32> to vector<32x400xf32>
    %31 = vector.broadcast %26 : vector<1x400xf32> to vector<32x400xf32>
    %32 = arith.mulf %30, %31 : vector<32x400xf32>
    %33 = vector.extract_strided_slice %28 {offsets = [0, 1], sizes = [32, 1], strides = [1, 1]} : vector<32x2xf32> to vector<32x1xf32>
    %34 = vector.broadcast %33 : vector<32x1xf32> to vector<32x400xf32>
    %35 = vector.broadcast %27 : vector<1x400xf32> to vector<32x400xf32>
    %36 = arith.mulf %34, %35 : vector<32x400xf32>
    %37 = arith.addf %32, %36 : vector<32x400xf32>
    %c0_7 = arith.constant 0 : index
    %c0_8 = arith.constant 0 : index
    %38 = vector.load %arg3[%c0_7, %c0_8] : memref<32x1xf32, #tpu.memory_space<vmem>>, vector<32x1xf32>
    %39 = vector.broadcast %38 : vector<32x1xf32> to vector<32x400xf32>
    %40 = arith.addf %37, %39 : vector<32x400xf32>
    %cst = arith.constant 0.000000e+00 : f32
    %41 = vector.broadcast %cst : f32 to vector<32x400xf32>
    %42 = arith.maximumf %40, %41 : vector<32x400xf32>
    %c0_9 = arith.constant 0 : index
    %c0_10 = arith.constant 0 : index
    %43 = vector.load %arg4[%c0_9, %c0_10] : memref<32x32xf32, #tpu.memory_space<vmem>>, vector<32x32xf32>
    %cst_11 = arith.constant dense<0.000000e+00> : vector<32x400xf32>
    %44 = tpu.matmul %43, %42, %cst_11 {dimension_numbers = #tpu.dot_dimension_numbers<[1], [0], [0], [1], [0, 0, 1, 1], [], []>} : vector<32x32xf32>, vector<32x400xf32>, vector<32x400xf32> -> vector<32x400xf32>
    %c0_12 = arith.constant 0 : index
    %c0_13 = arith.constant 0 : index
    %45 = vector.load %arg5[%c0_12, %c0_13] : memref<32x1xf32, #tpu.memory_space<vmem>>, vector<32x1xf32>
    %46 = vector.broadcast %45 : vector<32x1xf32> to vector<32x400xf32>
    %47 = arith.addf %44, %46 : vector<32x400xf32>
    %cst_14 = arith.constant 5.000000e-01 : f32
    %48 = vector.broadcast %cst_14 : f32 to vector<32x400xf32>
    %49 = arith.mulf %48, %47 : vector<32x400xf32>
    %50 = math.tanh %49 : vector<32x400xf32>
    %cst_15 = arith.constant 5.000000e-01 : f32
    %51 = vector.broadcast %cst_15 : f32 to vector<32x400xf32>
    %52 = arith.mulf %51, %50 : vector<32x400xf32>
    %cst_16 = arith.constant 5.000000e-01 : f32
    %53 = vector.broadcast %cst_16 : f32 to vector<32x400xf32>
    %54 = arith.addf %52, %53 : vector<32x400xf32>
    %c0_17 = arith.constant 0 : index
    %c0_18 = arith.constant 0 : index
    %55 = vector.load %arg6[%c0_17, %c0_18] : memref<1x32xf32, #tpu.memory_space<vmem>>, vector<1x32xf32>
    %cst_19 = arith.constant dense<0.000000e+00> : vector<1x400xf32>
    %56 = tpu.matmul %55, %54, %cst_19 {dimension_numbers = #tpu.dot_dimension_numbers<[1], [0], [0], [1], [0, 0, 1, 1], [], []>} : vector<1x32xf32>, vector<32x400xf32>, vector<1x400xf32> -> vector<1x400xf32>
    %c0_20 = arith.constant 0 : index
    %c0_21 = arith.constant 0 : index
    %57 = vector.load %arg7[%c0_20, %c0_21] : memref<1x1xf32, #tpu.memory_space<vmem>>, vector<1x1xf32>
    %58 = vector.broadcast %57 : vector<1x1xf32> to vector<1x400xf32>
    %59 = arith.addf %56, %58 : vector<1x400xf32>
    %cst_22 = arith.constant 5.000000e-01 : f32
    %60 = vector.broadcast %cst_22 : f32 to vector<1x400xf32>
    %61 = arith.mulf %60, %59 : vector<1x400xf32>
    %62 = math.tanh %61 : vector<1x400xf32>
    %cst_23 = arith.constant 5.000000e-01 : f32
    %63 = vector.broadcast %cst_23 : f32 to vector<1x400xf32>
    %64 = arith.mulf %63, %62 : vector<1x400xf32>
    %cst_24 = arith.constant 5.000000e-01 : f32
    %65 = vector.broadcast %cst_24 : f32 to vector<1x400xf32>
    %66 = arith.addf %64, %65 : vector<1x400xf32>
    %cst_25 = arith.constant 1.000000e+00 : f32
    %67 = vector.broadcast %cst_25 : f32 to vector<1x400xf32>
    %68 = arith.subf %67, %66 : vector<1x400xf32>
    %69 = arith.select %19, %66, %68 : vector<1x400xi1>, vector<1x400xf32>
    %c0_26 = arith.constant 0 : index
    %c0_27 = arith.constant 0 : index
    %70 = vector.load %arg8[%c0_26, %c0_27] : memref<1x400xf32, #tpu.memory_space<vmem>>, vector<1x400xf32>
    tpu.vector_store %arg8[%c0_26, %c0_27], %69 {strides = array<i32>} : memref<1x400xf32, #tpu.memory_space<vmem>>, vector<1x400xf32>,
    return
  }
  func.func @transform_0(%arg0: i32) -> (i32, i32) {
    %c0_i32 = arith.constant 0 : i32
    %c0_i32_0 = arith.constant 0 : i32
    return %c0_i32, %arg0 : i32, i32
  }
  func.func @transform_1(%arg0: i32) -> (i32, i32) {
    %c0_i32 = arith.constant 0 : i32
    %c0_i32_0 = arith.constant 0 : i32
    %c0_i32_1 = arith.constant 0 : i32
    return %c0_i32, %c0_i32_0 : i32, i32
  }
  func.func @transform_2(%arg0: i32) -> (i32, i32) {
    %c0_i32 = arith.constant 0 : i32
    %c0_i32_0 = arith.constant 0 : i32
    %c0_i32_1 = arith.constant 0 : i32
    return %c0_i32, %c0_i32_0 : i32, i32
  }
  func.func @transform_3(%arg0: i32) -> (i32, i32) {
    %c0_i32 = arith.constant 0 : i32
    %c0_i32_0 = arith.constant 0 : i32
    %c0_i32_1 = arith.constant 0 : i32
    return %c0_i32, %c0_i32_0 : i32, i32
  }
  func.func @transform_4(%arg0: i32) -> (i32, i32) {
    %c0_i32 = arith.constant 0 : i32
    %c0_i32_0 = arith.constant 0 : i32
    %c0_i32_1 = arith.constant 0 : i32
    return %c0_i32, %c0_i32_0 : i32, i32
  }
  func.func @transform_5(%arg0: i32) -> (i32, i32) {
    %c0_i32 = arith.constant 0 : i32
    %c0_i32_0 = arith.constant 0 : i32
    %c0_i32_1 = arith.constant 0 : i32
    return %c0_i32, %c0_i32_0 : i32, i32
  }
  func.func @transform_6(%arg0: i32) -> (i32, i32) {
    %c0_i32 = arith.constant 0 : i32
    %c0_i32_0 = arith.constant 0 : i32
    %c0_i32_1 = arith.constant 0 : i32
    return %c0_i32, %c0_i32_0 : i32, i32
  }
  func.func @transform_7(%arg0: i32) -> (i32, i32) {
    %c0_i32 = arith.constant 0 : i32
    %c0_i32_0 = arith.constant 0 : i32
    return %c0_i32, %arg0 : i32, i32
  }
}

</mosaic_0001>

<llo_original>
// kernel: tpu_custom_call.1
$region0: #{tpu_custom_call.1}
  #allocation0 [shape = 'u32[]', space=smem, size = 0x4, offset = 0x4, fixed_abs, tag = 'smem constant byte address 0x4 - core index']
  #allocation1 [shape = 'u32[144,128]{1,0:T(1,128)}', space=vmem, size = 0x12000, scoped, tag = 'internal scratch']
  #allocation2 [shape = 'f32[1,1]{1,0:T(1,128)S(1)}', space=vmem, size = 0x200, scoped, tag = 'scoped memory for tpu_custom_call.1']
  %s0 = inlined_call_operand.vmem [shape: f32[1,400], index: 0, kind: input, shape index: {}]
  %s1 = inlined_call_operand.vmem [shape: f32[32,2], index: 1, kind: input, shape index: {}]
  %s2 = inlined_call_operand.vmem [shape: f32[32,1], index: 2, kind: input, shape index: {}]
  %s3 = inlined_call_operand.vmem [shape: f32[32,32], index: 3, kind: input, shape index: {}]
  %s4 = inlined_call_operand.vmem [shape: f32[32,1], index: 4, kind: input, shape index: {}]
  %s5 = inlined_call_operand.vmem [shape: f32[1,32], index: 5, kind: input, shape index: {}]
  %s6 = inlined_call_operand.<no memory space> [shape: f32[1,1], index: 6, kind: input, shape index: {}]
  %s7 = inlined_call_operand.hbm [shape: f32[1,400], index: 7, kind: output, shape index: {}]
  %s8 = sld [smem:[#allocation0]]
  $region38: #{tpu_custom_call.1} parent=0
    _
  %s10 = ssub.s32 1, %s8
  %s11 = scalar_select 0, %s10, %s8
  %v12 = vstv %s6
  %13 = vst [vmem:[#allocation2] sm:$0x1] %v12
  $region1: #{tpu_custom_call.1} parent=0
    #allocation3 [shape = 'u8[2048]{0}', space=vmem, size = 0x800, scoped, tag = 'output window, operand 0, single buffered']
    #allocation4 [shape = 's32[1]{0}', space=sflag, size = 0x4, scoped, tag = 'scoped memory for tpu_custom_call.1']
    %14 = vsyncpa [#allocation4], 0
    // Predicated region
    $region2: #{tpu_custom_call.1} parent=1 // pred_check
      _
    $region3: #{tpu_custom_call.1} parent=1 // pred_check_branch
      %16 = sbr.rel (0) target = $region5
    $region4: #{tpu_custom_call.1} parent=1 // pred_region
      _
    $region5: #{tpu_custom_call.1} parent=1 // pred_fallthru
      _
    // Predicated region
    $region6: #{tpu_custom_call.1} parent=1 // pred_check
      _
    $region7: #{tpu_custom_call.1} parent=1 // pred_check_branch
      %18 = sbr.rel (0) target = $region9
    $region8: #{tpu_custom_call.1} parent=1 // pred_region
      _
    $region9: #{tpu_custom_call.1} parent=1 // pred_fallthru
      _
    // Predicated region
    $region10: #{tpu_custom_call.1} parent=1 // pred_check
      _
    $region11: #{tpu_custom_call.1} parent=1 // pred_check_branch
      %20 = sbr.rel (0) target = $region13
    $region12: #{tpu_custom_call.1} parent=1 // pred_region
      _
    $region13: #{tpu_custom_call.1} parent=1 // pred_fallthru
      _
    // Predicated region
    $region14: #{tpu_custom_call.1} parent=1 // pred_check
      _
    $region15: #{tpu_custom_call.1} parent=1 // pred_check_branch
      %22 = sbr.rel (0) target = $region17
    $region16: #{tpu_custom_call.1} parent=1 // pred_region
      _
    $region17: #{tpu_custom_call.1} parent=1 // pred_fallthru
      _
    // Predicated region
    $region18: #{tpu_custom_call.1} parent=1 // pred_check
      _
    $region19: #{tpu_custom_call.1} parent=1 // pred_check_branch
      %24 = sbr.rel (0) target = $region21
    $region20: #{tpu_custom_call.1} parent=1 // pred_region
      _
    $region21: #{tpu_custom_call.1} parent=1 // pred_fallthru
      _
    // Predicated region
    $region22: #{tpu_custom_call.1} parent=1 // pred_check
      _
    $region23: #{tpu_custom_call.1} parent=1 // pred_check_branch
      %26 = sbr.rel (0) target = $region25
    $region24: #{tpu_custom_call.1} parent=1 // pred_region
      _
    $region25: #{tpu_custom_call.1} parent=1 // pred_fallthru
      _
    // Predicated region
    $region26: #{tpu_custom_call.1} parent=1 // pred_check
      _
    $region27: #{tpu_custom_call.1} parent=1 // pred_check_branch
      %28 = sbr.rel (0) target = $region29
    $region28: #{tpu_custom_call.1} parent=1 // pred_region
      _
    $region29: #{tpu_custom_call.1} parent=1 // pred_fallthru
      _
    %v29 = vld [vmem:[%s0] sm:$0xf]
    %v30 = vlaneseq
    %v31 = vand.u32 %v30, 127
    %v32 = vadd.s32 %v31, 128
    %v33 = vadd.s32 %v31, 256
    %v34 = vadd.s32 %v31, 384
    %vm35 = vcmp.lt.s32.totalorder %v31, 0
    %v36 = vsub.s32 0, %v31
    %v37 = vsel %vm35, %v36, %v31
    %v38 = vshrl.u32 %v37, 1
    %v39 = vand.u32 %v37, 1
    %v40 = vsub.s32 0, %v39
    %v41 = vsel %vm35, %v40, %v39
    %vm42 = vcmp.lt.s32.totalorder %v32, 0
    %v43 = vsub.s32 0, %v32
    %v44 = vsel %vm42, %v43, %v32
    %v45 = vshrl.u32 %v44, 1
    %v46 = vand.u32 %v44, 1
    %v47 = vsub.s32 0, %v46
    %v48 = vsel %vm42, %v47, %v46
    %vm49 = vcmp.lt.s32.totalorder %v33, 0
    %v50 = vsub.s32 0, %v33
    %v51 = vsel %vm49, %v50, %v33
    %v52 = vshrl.u32 %v51, 1
    %v53 = vand.u32 %v51, 1
    %v54 = vsub.s32 0, %v53
    %v55 = vsel %vm49, %v54, %v53
    %vm56 = vcmp.lt.s32.totalorder %v34, 0
    %v57 = vsub.s32 0, %v34
    %v58 = vsel %vm56, %v57, %v34
    %v59 = vshrl.u32 %v58, 1
    %v60 = vand.u32 %v58, 1
    %v61 = vsub.s32 0, %v60
    %v62 = vsel %vm56, %v61, %v60
    %vm63 = vcmp.ne.s32.totalorder %v41, 0
    %vm64 = vcmp.ne.s32.totalorder %v48, 0
    %vm65 = vcmp.ne.s32.totalorder %v55, 0
    %vm66 = vcmp.ne.s32.totalorder %v62, 0
    %vm67 = vcmp.lt.s32.totalorder %v41, 0
    %vm68 = vcmp.lt.s32.totalorder %v48, 0
    %vm69 = vcmp.lt.s32.totalorder %v55, 0
    %vm70 = vcmp.lt.s32.totalorder %v62, 0
    %vm71 = vmand %vm67, %vm63
    %vm72 = vmand %vm68, %vm64
    %vm73 = vmand %vm69, %vm65
    %vm74 = vmand %vm70, %vm66
    %v75 = vadd.s32 %v41, 2
    %v76 = vadd.s32 %v48, 2
    %v77 = vadd.s32 %v55, 2
    %v78 = vadd.s32 %v62, 2
    %v79 = vsel %vm71, %v75, %v41
    %v80 = vsel %vm72, %v76, %v48
    %v81 = vsel %vm73, %v77, %v55
    %v82 = vsel %vm74, %v78, %v62
    %vm83 = vcmp.eq.s32.totalorder %v79, 0
    %vm84 = vcmp.eq.s32.totalorder %v80, 0
    %vm85 = vcmp.eq.s32.totalorder %v81, 0
    %vm86 = vcmp.eq.s32.totalorder %v82, 0
    %v88 = vlaneseq
    %v89 = vshrl.u32 %v88, 7
    %v90 = vsub.s32 0, %v89
    %v91 = vrot.slane %v29, %v90
    %v92 = vlaneseq
    %v93 = vshrl.u32 %v92, 7
    %v94 = vsub.s32 1, %v93
    %v95 = vrot.slane %v29, %v94
    %v96 = vlaneseq
    %v97 = vshrl.u32 %v96, 7
    %v98 = vsub.s32 2, %v97
    %v99 = vrot.slane %v29, %v98
    %v100 = vlaneseq
    %v101 = vshrl.u32 %v100, 7
    %v102 = vsub.s32 3, %v101
    %v103 = vrot.slane %v29, %v102
    %104 = vrot.lane.b32.xlu0 %v91, 127
    %v105 = vpop.permute.xlu0 %104
    %106 = vrot.lane.b32.xlu0 %v95, 127
    %v107 = vpop.permute.xlu0 %106
    %108 = vrot.lane.b32.xlu0 %v99, 127
    %v109 = vpop.permute.xlu0 %108
    %110 = vrot.lane.b32.xlu0 %v103, 127
    %v111 = vpop.permute.xlu0 %110
    %vm112 = vcmask 1039360
    %v113 = vsel %vm112, %v105, %v107
    %v114 = vsel %vm112, %v107, %v109
    %v115 = vsel %vm112, %v109, %v111
    %120 = vrot.lane.b32.xlu0 %v91, 15
    %v121 = vpop.permute.xlu0 %120
    %vm123 = vcmask 121856
    %v124 = vsel %vm123, %v111, %v121
    %125 = vrot.lane.b32.xlu0 %v103, 113
    %v126 = vpop.permute.xlu0 %125
    %128 = vrot.lane.b32.xlu0 %v91, 1
    %v129 = vpop.permute.xlu0 %128
    %130 = vrot.lane.b32.xlu0 %v95, 1
    %v131 = vpop.permute.xlu0 %130
    %132 = vrot.lane.b32.xlu0 %v99, 1
    %v133 = vpop.permute.xlu0 %132
    %134 = vrot.lane.b32.xlu0 %v103, 1
    %v135 = vpop.permute.xlu0 %134
    %vm136 = vcmask 7168
    %v137 = vsel %vm136, %v129, %v131
    %v138 = vsel %vm136, %v131, %v133
    %v139 = vsel %vm136, %v133, %v135
    %v144 = vsel %vm136, %v126, %v129
    %v149 = vsel %vm83, %v91, %v144
    %v150 = vsel %vm84, %v95, %v137
    %v151 = vsel %vm85, %v99, %v138
    %v152 = vsel %vm86, %v103, %v139
    %v153 = vsel %vm83, %v113, %v91
    %v154 = vsel %vm84, %v114, %v95
    %v155 = vsel %vm85, %v115, %v99
    %v156 = vsel %vm86, %v124, %v103
    %v157 = vld [vmem:[%s1] sm:$0xff]
    %v158 = vld [vmem:[%s1 + $0x8] sm:$0xff]
    %v159 = vld [vmem:[%s1 + $0x10] sm:$0xff]
    %v160 = vld [vmem:[%s1 + $0x18] sm:$0xff]
    %162 = vset.pattern.permute.xlu0 0
    %163 = vperm.xlu0 %162, %v157
    %v164 = vpop.permute.xlu0 %163
    %167 = vset.pattern.permute.xlu0 0
    %168 = vperm.xlu0 %167, %v158
    %v169 = vpop.permute.xlu0 %168
    %172 = vset.pattern.permute.xlu0 0
    %173 = vperm.xlu0 %172, %v159
    %v174 = vpop.permute.xlu0 %173
    %177 = vset.pattern.permute.xlu0 0
    %178 = vperm.xlu0 %177, %v160
    %v179 = vpop.permute.xlu0 %178
    %v181 = vlaneseq
    %v182 = vshrl.u32 %v181, 7
    %v183 = vsub.s32 0, %v182
    %v184 = vrot.slane %v149, %v183
    %v185 = vlaneseq
    %v186 = vshrl.u32 %v185, 7
    %v187 = vsub.s32 0, %v186
    %v188 = vrot.slane %v150, %v187
    %v189 = vlaneseq
    %v190 = vshrl.u32 %v189, 7
    %v191 = vsub.s32 0, %v190
    %v192 = vrot.slane %v151, %v191
    %v193 = vlaneseq
    %v194 = vshrl.u32 %v193, 7
    %v195 = vsub.s32 0, %v194
    %v196 = vrot.slane %v152, %v195
    %v197 = vmul.f32 %v164, %v184
    %v198 = vmul.f32 %v164, %v188
    %v199 = vmul.f32 %v164, %v192
    %v200 = vmul.f32 %v164, %v196
    %v201 = vmul.f32 %v169, %v184
    %v202 = vmul.f32 %v169, %v188
    %v203 = vmul.f32 %v169, %v192
    %v204 = vmul.f32 %v169, %v196
    %v205 = vmul.f32 %v174, %v184
    %v206 = vmul.f32 %v174, %v188
    %v207 = vmul.f32 %v174, %v192
    %v208 = vmul.f32 %v174, %v196
    %v209 = vmul.f32 %v179, %v184
    %v210 = vmul.f32 %v179, %v188
    %v211 = vmul.f32 %v179, %v192
    %v212 = vmul.f32 %v179, %v196
    %213 = vset.pattern.permute.xlu0 1
    %214 = vperm.xlu0 %213, %v157
    %v215 = vpop.permute.xlu0 %214
    %217 = vset.pattern.permute.xlu0 1
    %218 = vperm.xlu0 %217, %v158
    %v219 = vpop.permute.xlu0 %218
    %221 = vset.pattern.permute.xlu0 1
    %222 = vperm.xlu0 %221, %v159
    %v223 = vpop.permute.xlu0 %222
    %225 = vset.pattern.permute.xlu0 1
    %226 = vperm.xlu0 %225, %v160
    %v227 = vpop.permute.xlu0 %226
    %v229 = vlaneseq
    %v230 = vshrl.u32 %v229, 7
    %v231 = vsub.s32 0, %v230
    %v232 = vrot.slane %v153, %v231
    %v233 = vlaneseq
    %v234 = vshrl.u32 %v233, 7
    %v235 = vsub.s32 0, %v234
    %v236 = vrot.slane %v154, %v235
    %v237 = vlaneseq
    %v238 = vshrl.u32 %v237, 7
    %v239 = vsub.s32 0, %v238
    %v240 = vrot.slane %v155, %v239
    %v241 = vlaneseq
    %v242 = vshrl.u32 %v241, 7
    %v243 = vsub.s32 0, %v242
    %v244 = vrot.slane %v156, %v243
    %v245 = vmul.f32 %v215, %v232
    %v246 = vmul.f32 %v215, %v236
    %v247 = vmul.f32 %v215, %v240
    %v248 = vmul.f32 %v215, %v244
    %v249 = vmul.f32 %v219, %v232
    %v250 = vmul.f32 %v219, %v236
    %v251 = vmul.f32 %v219, %v240
    %v252 = vmul.f32 %v219, %v244
    %v253 = vmul.f32 %v223, %v232
    %v254 = vmul.f32 %v223, %v236
    %v255 = vmul.f32 %v223, %v240
    %v256 = vmul.f32 %v223, %v244
    %v257 = vmul.f32 %v227, %v232
    %v258 = vmul.f32 %v227, %v236
    %v259 = vmul.f32 %v227, %v240
    %v260 = vmul.f32 %v227, %v244
    %v261 = vadd.f32 %v197, %v245
    %v262 = vadd.f32 %v198, %v246
    %v263 = vadd.f32 %v199, %v247
    %v264 = vadd.f32 %v200, %v248
    %v265 = vadd.f32 %v201, %v249
    %v266 = vadd.f32 %v202, %v250
    %v267 = vadd.f32 %v203, %v251
    %v268 = vadd.f32 %v204, %v252
    %v269 = vadd.f32 %v205, %v253
    %v270 = vadd.f32 %v206, %v254
    %v271 = vadd.f32 %v207, %v255
    %v272 = vadd.f32 %v208, %v256
    %v273 = vadd.f32 %v209, %v257
    %v274 = vadd.f32 %v210, %v258
    %v275 = vadd.f32 %v211, %v259
    %v276 = vadd.f32 %v212, %v260
    %v277 = vld [vmem:[%s2] sm:$0xff]
    %v278 = vld [vmem:[%s2 + $0x8] sm:$0xff]
    %v279 = vld [vmem:[%s2 + $0x10] sm:$0xff]
    %v280 = vld [vmem:[%s2 + $0x18] sm:$0xff]
    %282 = vset.pattern.permute.xlu0 0
    %283 = vperm.xlu0 %282, %v277
    %v284 = vpop.permute.xlu0 %283
    %287 = vset.pattern.permute.xlu0 0
    %288 = vperm.xlu0 %287, %v278
    %v289 = vpop.permute.xlu0 %288
    %292 = vset.pattern.permute.xlu0 0
    %293 = vperm.xlu0 %292, %v279
    %v294 = vpop.permute.xlu0 %293
    %297 = vset.pattern.permute.xlu0 0
    %298 = vperm.xlu0 %297, %v280
    %v299 = vpop.permute.xlu0 %298
    %v301 = vadd.f32 %v261, %v284
    %v302 = vadd.f32 %v262, %v284
    %v303 = vadd.f32 %v263, %v284
    %v304 = vadd.f32 %v264, %v284
    %v305 = vadd.f32 %v265, %v289
    %v306 = vadd.f32 %v266, %v289
    %v307 = vadd.f32 %v267, %v289
    %v308 = vadd.f32 %v268, %v289
    %v309 = vadd.f32 %v269, %v294
    %v310 = vadd.f32 %v270, %v294
    %v311 = vadd.f32 %v271, %v294
    %v312 = vadd.f32 %v272, %v294
    %v313 = vadd.f32 %v273, %v299
    %v314 = vadd.f32 %v274, %v299
    %v315 = vadd.f32 %v275, %v299
    %v316 = vadd.f32 %v276, %v299
    %v317 = vmax.f32 %v301, 0.0
    %v318 = vmax.f32 %v302, 0.0
    %v319 = vmax.f32 %v303, 0.0
    %v320 = vmax.f32 %v304, 0.0
    %v321 = vmax.f32 %v305, 0.0
    %v322 = vmax.f32 %v306, 0.0
    %v323 = vmax.f32 %v307, 0.0
    %v324 = vmax.f32 %v308, 0.0
    %v325 = vmax.f32 %v309, 0.0
    %v326 = vmax.f32 %v310, 0.0
    %v327 = vmax.f32 %v311, 0.0
    %v328 = vmax.f32 %v312, 0.0
    %v329 = vmax.f32 %v313, 0.0
    %v330 = vmax.f32 %v314, 0.0
    %v331 = vmax.f32 %v315, 0.0
    %v332 = vmax.f32 %v316, 0.0
    %v333 = vld [vmem:[%s3] sm:$0xff]
    %v334 = vld [vmem:[%s3 + $0x8] sm:$0xff]
    %v335 = vld [vmem:[%s3 + $0x10] sm:$0xff]
    %v336 = vld [vmem:[%s3 + $0x18] sm:$0xff]
    %v337 = vld [vmem:[%s4] sm:$0xff]
    %v338 = vld [vmem:[%s4 + $0x8] sm:$0xff]
    %v339 = vld [vmem:[%s4 + $0x10] sm:$0xff]
    %v340 = vld [vmem:[%s4 + $0x18] sm:$0xff]
    %342 = vset.pattern.permute.xlu0 0
    %343 = vperm.xlu0 %342, %v337
    %v344 = vpop.permute.xlu0 %343
    %347 = vset.pattern.permute.xlu0 0
    %348 = vperm.xlu0 %347, %v338
    %v349 = vpop.permute.xlu0 %348
    %352 = vset.pattern.permute.xlu0 0
    %353 = vperm.xlu0 %352, %v339
    %v354 = vpop.permute.xlu0 %353
    %357 = vset.pattern.permute.xlu0 0
    %358 = vperm.xlu0 %357, %v340
    %v359 = vpop.permute.xlu0 %358
    %vm361 = vcmask 261120
    %v363 = vsel %vm361, %v333, 0
    %v366 = vsel %vm361, %v334, 0
    %v369 = vsel %vm361, %v335, 0
    %v372 = vsel %vm361, %v336, 0
    %374 = vmatprep.subr.mxu0 0.0
    %375 = vmatpush1.msra.mxu0 0.0
    %376 = vmatprep.subr.mxu0 0.0
    %377 = vmatpush1.msra.mxu0 0.0
    %378 = vmatprep.subr.mxu0 0.0
    %379 = vmatpush1.msra.mxu0 0.0
    %380 = vmatprep.subr.mxu0 0.0
    %381 = vmatpush1.msra.mxu0 0.0
    %382 = vmatprep.subr.mxu0 0.0
    %383 = vmatpush1.msra.mxu0 0.0
    %384 = vmatprep.subr.mxu0 0.0
    %385 = vmatpush1.msra.mxu0 0.0
    %386 = vmatprep.subr.mxu0 0.0
    %387 = vmatpush1.msra.mxu0 0.0
    %388 = vmatprep.subr.mxu0 0.0
    %389 = vmatpush1.msra.mxu0 0.0
    %390 = vmatprep.subr.mxu0 0.0
    %391 = vmatpush1.msra.mxu0 0.0
    %392 = vmatprep.subr.mxu0 0.0
    %393 = vmatpush1.msra.mxu0 0.0
    %394 = vmatprep.subr.mxu0 0.0
    %395 = vmatpush1.msra.mxu0 0.0
    %396 = vmatprep.subr.mxu0 0.0
    %397 = vmatpush1.msra.mxu0 0.0
    %398 = vmatprep.subr.mxu0 %v330
    %399 = vmatpush1.msra.mxu0 %v329
    %400 = vmatprep.subr.mxu0 %v326
    %401 = vmatpush1.msra.mxu0 %v325
    %402 = vmatprep.subr.mxu0 %v322
    %403 = vmatpush1.msra.mxu0 %v321
    %404 = vmatprep.subr.mxu0 %v318
    %405 = vmatpush1.msra.mxu0 %v317
    %406 = vmatprep.subr.mxu0 0.0
    %407 = vmatpush2.msra.mxu0 0.0
    %408 = vmatprep.subr.mxu0 0.0
    %409 = vmatpush2.msra.mxu0 0.0
    %410 = vmatprep.subr.mxu0 0.0
    %411 = vmatpush2.msra.mxu0 0.0
    %412 = vmatprep.subr.mxu0 0.0
    %413 = vmatpush2.msra.mxu0 0.0
    %414 = vmatprep.subr.mxu0 0.0
    %415 = vmatpush2.msra.mxu0 0.0
    %416 = vmatprep.subr.mxu0 0.0
    %417 = vmatpush2.msra.mxu0 0.0
    %418 = vmatprep.subr.mxu0 0.0
    %419 = vmatpush2.msra.mxu0 0.0
    %420 = vmatprep.subr.mxu0 0.0
    %421 = vmatpush2.msra.mxu0 0.0
    %422 = vmatprep.subr.mxu0 0.0
    %423 = vmatpush2.msra.mxu0 0.0
    %424 = vmatprep.subr.mxu0 0.0
    %425 = vmatpush2.msra.mxu0 0.0
    %426 = vmatprep.subr.mxu0 0.0
    %427 = vmatpush2.msra.mxu0 0.0
    %428 = vmatprep.subr.mxu0 0.0
    %429 = vmatpush2.msra.mxu0 0.0
    %430 = vmatprep.subr.mxu0 0.0
    %431 = vmatpush2.msra.mxu0 0.0
    %432 = vmatprep.subr.mxu0 0.0
    %433 = vmatpush2.msra.mxu0 0.0
    %434 = vmatprep.subr.mxu0 0.0
    %435 = vmatpush2.msra.mxu0 0.0
    %436 = vmatprep.subr.mxu0 0.0
    %437 = vmatpush2.msra.mxu0 0.0
    %438 = vmatprep.mubr.f32.mxu0 0.0
    %439 = vmatmul.mubr.f32.gmra.mxu0 %v363
    %v440 = vpop.f32.mrf.mxu0
    %v441 = vadd.f32 %v344, %v440
    %v442 = vpop.f32.mrf.mxu0
    %v443 = vadd.f32 %v344, %v442
    %444 = vmatprep.mubr.f32.mxu0 0.0
    %445 = vmatmul.mubr.f32.gmra.mxu0 %v366
    %v446 = vpop.f32.mrf.mxu0
    %v447 = vadd.f32 %v349, %v446
    %v448 = vpop.f32.mrf.mxu0
    %v449 = vadd.f32 %v349, %v448
    %450 = vmatprep.mubr.f32.mxu0 0.0
    %451 = vmatmul.mubr.f32.gmra.mxu0 %v369
    %v452 = vpop.f32.mrf.mxu0
    %v453 = vadd.f32 %v354, %v452
    %v454 = vpop.f32.mrf.mxu0
    %v455 = vadd.f32 %v354, %v454
    %456 = vmatprep.mubr.f32.mxu0 0.0
    %457 = vmatmul.mubr.f32.gmra.mxu0 %v372
    %v458 = vpop.f32.mrf.mxu0
    %v459 = vadd.f32 %v359, %v458
    %v460 = vpop.f32.mrf.mxu0
    %v461 = vadd.f32 %v359, %v460
    %462 = vdwg.mxu0
    %463 = vmatprep.subr.mxu0 0.0
    %464 = vmatpush1.msra.mxu0 0.0
    %465 = vmatprep.subr.mxu0 0.0
    %466 = vmatpush1.msra.mxu0 0.0
    %467 = vmatprep.subr.mxu0 0.0
    %468 = vmatpush1.msra.mxu0 0.0
    %469 = vmatprep.subr.mxu0 0.0
    %470 = vmatpush1.msra.mxu0 0.0
    %471 = vmatprep.subr.mxu0 0.0
    %472 = vmatpush1.msra.mxu0 0.0
    %473 = vmatprep.subr.mxu0 0.0
    %474 = vmatpush1.msra.mxu0 0.0
    %475 = vmatprep.subr.mxu0 0.0
    %476 = vmatpush1.msra.mxu0 0.0
    %477 = vmatprep.subr.mxu0 0.0
    %478 = vmatpush1.msra.mxu0 0.0
    %479 = vmatprep.subr.mxu0 0.0
    %480 = vmatpush1.msra.mxu0 0.0
    %481 = vmatprep.subr.mxu0 0.0
    %482 = vmatpush1.msra.mxu0 0.0
    %483 = vmatprep.subr.mxu0 0.0
    %484 = vmatpush1.msra.mxu0 0.0
    %485 = vmatprep.subr.mxu0 0.0
    %486 = vmatpush1.msra.mxu0 0.0
    %487 = vmatprep.subr.mxu0 %v332
    %488 = vmatpush1.msra.mxu0 %v331
    %489 = vmatprep.subr.mxu0 %v328
    %490 = vmatpush1.msra.mxu0 %v327
    %491 = vmatprep.subr.mxu0 %v324
    %492 = vmatpush1.msra.mxu0 %v323
    %493 = vmatprep.subr.mxu0 %v320
    %494 = vmatpush1.msra.mxu0 %v319
    %495 = vmatprep.subr.mxu0 0.0
    %496 = vmatpush2.msra.mxu0 0.0
    %497 = vmatprep.subr.mxu0 0.0
    %498 = vmatpush2.msra.mxu0 0.0
    %499 = vmatprep.subr.mxu0 0.0
    %500 = vmatpush2.msra.mxu0 0.0
    %501 = vmatprep.subr.mxu0 0.0
    %502 = vmatpush2.msra.mxu0 0.0
    %503 = vmatprep.subr.mxu0 0.0
    %504 = vmatpush2.msra.mxu0 0.0
    %505 = vmatprep.subr.mxu0 0.0
    %506 = vmatpush2.msra.mxu0 0.0
    %507 = vmatprep.subr.mxu0 0.0
    %508 = vmatpush2.msra.mxu0 0.0
    %509 = vmatprep.subr.mxu0 0.0
    %510 = vmatpush2.msra.mxu0 0.0
    %511 = vmatprep.subr.mxu0 0.0
    %512 = vmatpush2.msra.mxu0 0.0
    %513 = vmatprep.subr.mxu0 0.0
    %514 = vmatpush2.msra.mxu0 0.0
    %515 = vmatprep.subr.mxu0 0.0
    %516 = vmatpush2.msra.mxu0 0.0
    %517 = vmatprep.subr.mxu0 0.0
    %518 = vmatpush2.msra.mxu0 0.0
    %519 = vmatprep.subr.mxu0 0.0
    %520 = vmatpush2.msra.mxu0 0.0
    %521 = vmatprep.subr.mxu0 0.0
    %522 = vmatpush2.msra.mxu0 0.0
    %523 = vmatprep.subr.mxu0 0.0
    %524 = vmatpush2.msra.mxu0 0.0
    %525 = vmatprep.subr.mxu0 0.0
    %526 = vmatpush2.msra.mxu0 0.0
    %527 = vmatprep.mubr.f32.mxu0 0.0
    %528 = vmatmul.mubr.f32.gmra.mxu0 %v363
    %v529 = vpop.f32.mrf.mxu0
    %v530 = vadd.f32 %v344, %v529
    %v531 = vpop.f32.mrf.mxu0
    %v532 = vadd.f32 %v344, %v531
    %533 = vmatprep.mubr.f32.mxu0 0.0
    %534 = vmatmul.mubr.f32.gmra.mxu0 %v366
    %v535 = vpop.f32.mrf.mxu0
    %v536 = vadd.f32 %v349, %v535
    %v537 = vpop.f32.mrf.mxu0
    %v538 = vadd.f32 %v349, %v537
    %539 = vmatprep.mubr.f32.mxu0 0.0
    %540 = vmatmul.mubr.f32.gmra.mxu0 %v369
    %v541 = vpop.f32.mrf.mxu0
    %v542 = vadd.f32 %v354, %v541
    %v543 = vpop.f32.mrf.mxu0
    %v544 = vadd.f32 %v354, %v543
    %545 = vmatprep.mubr.f32.mxu0 0.0
    %546 = vmatmul.mubr.f32.gmra.mxu0 %v372
    %v547 = vpop.f32.mrf.mxu0
    %v548 = vadd.f32 %v359, %v547
    %v549 = vpop.f32.mrf.mxu0
    %v550 = vadd.f32 %v359, %v549
    %551 = vdwg.mxu0
    %v552 = vmul.f32 %v441, 0.5
    %v553 = vmul.f32 %v443, 0.5
    %v554 = vmul.f32 %v530, 0.5
    %v555 = vmul.f32 %v532, 0.5
    %v556 = vmul.f32 %v447, 0.5
    %v557 = vmul.f32 %v449, 0.5
    %v558 = vmul.f32 %v536, 0.5
    %v559 = vmul.f32 %v538, 0.5
    %v560 = vmul.f32 %v453, 0.5
    %v561 = vmul.f32 %v455, 0.5
    %v562 = vmul.f32 %v542, 0.5
    %v563 = vmul.f32 %v544, 0.5
    %v564 = vmul.f32 %v459, 0.5
    %v565 = vmul.f32 %v461, 0.5
    %v566 = vmul.f32 %v548, 0.5
    %v567 = vmul.f32 %v550, 0.5
    %v568 = vtanh.pop %v552
    %v569 = vtanh.pop %v553
    %v570 = vtanh.pop %v554
    %v571 = vtanh.pop %v555
    %v572 = vtanh.pop %v556
    %v573 = vtanh.pop %v557
    %v574 = vtanh.pop %v558
    %v575 = vtanh.pop %v559
    %v576 = vtanh.pop %v560
    %v577 = vtanh.pop %v561
    %v578 = vtanh.pop %v562
    %v579 = vtanh.pop %v563
    %v580 = vtanh.pop %v564
    %v581 = vtanh.pop %v565
    %v582 = vtanh.pop %v566
    %v583 = vtanh.pop %v567
    %v584 = vmul.f32 %v568, 0.5
    %v585 = vmul.f32 %v569, 0.5
    %v586 = vmul.f32 %v570, 0.5
    %v587 = vmul.f32 %v571, 0.5
    %v588 = vmul.f32 %v572, 0.5
    %v589 = vmul.f32 %v573, 0.5
    %v590 = vmul.f32 %v574, 0.5
    %v591 = vmul.f32 %v575, 0.5
    %v592 = vmul.f32 %v576, 0.5
    %v593 = vmul.f32 %v577, 0.5
    %v594 = vmul.f32 %v578, 0.5
    %v595 = vmul.f32 %v579, 0.5
    %v596 = vmul.f32 %v580, 0.5
    %v597 = vmul.f32 %v581, 0.5
    %v598 = vmul.f32 %v582, 0.5
    %v599 = vmul.f32 %v583, 0.5
    %v600 = vadd.f32 %v584, 0.5
    %v601 = vadd.f32 %v585, 0.5
    %v602 = vadd.f32 %v586, 0.5
    %v603 = vadd.f32 %v587, 0.5
    %v604 = vadd.f32 %v588, 0.5
    %v605 = vadd.f32 %v589, 0.5
    %v606 = vadd.f32 %v590, 0.5
    %v607 = vadd.f32 %v591, 0.5
    %v608 = vadd.f32 %v592, 0.5
    %v609 = vadd.f32 %v593, 0.5
    %v610 = vadd.f32 %v594, 0.5
    %v611 = vadd.f32 %v595, 0.5
    %v612 = vadd.f32 %v596, 0.5
    %v613 = vadd.f32 %v597, 0.5
    %v614 = vadd.f32 %v598, 0.5
    %v615 = vadd.f32 %v599, 0.5
    %v616 = vld [vmem:[%s5] sm:$0x1]
    %v617 = vld [vmem:[#allocation2] sm:$0x1]
    %619 = vset.pattern.permute.xlu0 0
    %620 = vperm.xlu0 %619, %v617
    %v621 = vpop.permute.xlu0 %620
    %v623 = vlaneseq
    %v624 = vshrl.u32 %v623, 7
    %v625 = vsub.s32 0, %v624
    %v626 = vrot.slane %v621, %v625
    %v628 = vsel %vm361, %v616, 0
    %630 = vmatprep.subr.mxu0 0.0
    %631 = vmatpush1.msra.mxu0 0.0
    %632 = vmatprep.subr.mxu0 0.0
    %633 = vmatpush1.msra.mxu0 0.0
    %634 = vmatprep.subr.mxu0 0.0
    %635 = vmatpush1.msra.mxu0 0.0
    %636 = vmatprep.subr.mxu0 0.0
    %637 = vmatpush1.msra.mxu0 0.0
    %638 = vmatprep.subr.mxu0 0.0
    %639 = vmatpush1.msra.mxu0 0.0
    %640 = vmatprep.subr.mxu0 0.0
    %641 = vmatpush1.msra.mxu0 0.0
    %642 = vmatprep.subr.mxu0 0.0
    %643 = vmatpush1.msra.mxu0 0.0
    %644 = vmatprep.subr.mxu0 0.0
    %645 = vmatpush1.msra.mxu0 0.0
    %646 = vmatprep.subr.mxu0 0.0
    %647 = vmatpush1.msra.mxu0 0.0
    %648 = vmatprep.subr.mxu0 0.0
    %649 = vmatpush1.msra.mxu0 0.0
    %650 = vmatprep.subr.mxu0 0.0
    %651 = vmatpush1.msra.mxu0 0.0
    %652 = vmatprep.subr.mxu0 0.0
    %653 = vmatpush1.msra.mxu0 0.0
    %654 = vmatprep.subr.mxu0 %v613
    %655 = vmatpush1.msra.mxu0 %v612
    %656 = vmatprep.subr.mxu0 %v609
    %657 = vmatpush1.msra.mxu0 %v608
    %658 = vmatprep.subr.mxu0 %v605
    %659 = vmatpush1.msra.mxu0 %v604
    %660 = vmatprep.subr.mxu0 %v601
    %661 = vmatpush1.msra.mxu0 %v600
    %662 = vmatprep.subr.mxu0 0.0
    %663 = vmatpush2.msra.mxu0 0.0
    %664 = vmatprep.subr.mxu0 0.0
    %665 = vmatpush2.msra.mxu0 0.0
    %666 = vmatprep.subr.mxu0 0.0
    %667 = vmatpush2.msra.mxu0 0.0
    %668 = vmatprep.subr.mxu0 0.0
    %669 = vmatpush2.msra.mxu0 0.0
    %670 = vmatprep.subr.mxu0 0.0
    %671 = vmatpush2.msra.mxu0 0.0
    %672 = vmatprep.subr.mxu0 0.0
    %673 = vmatpush2.msra.mxu0 0.0
    %674 = vmatprep.subr.mxu0 0.0
    %675 = vmatpush2.msra.mxu0 0.0
    %676 = vmatprep.subr.mxu0 0.0
    %677 = vmatpush2.msra.mxu0 0.0
    %678 = vmatprep.subr.mxu0 0.0
    %679 = vmatpush2.msra.mxu0 0.0
    %680 = vmatprep.subr.mxu0 0.0
    %681 = vmatpush2.msra.mxu0 0.0
    %682 = vmatprep.subr.mxu0 0.0
    %683 = vmatpush2.msra.mxu0 0.0
    %684 = vmatprep.subr.mxu0 0.0
    %685 = vmatpush2.msra.mxu0 0.0
    %686 = vmatprep.subr.mxu0 0.0
    %687 = vmatpush2.msra.mxu0 0.0
    %688 = vmatprep.subr.mxu0 0.0
    %689 = vmatpush2.msra.mxu0 0.0
    %690 = vmatprep.subr.mxu0 0.0
    %691 = vmatpush2.msra.mxu0 0.0
    %692 = vmatprep.subr.mxu0 0.0
    %693 = vmatpush2.msra.mxu0 0.0
    %694 = vmatprep.mubr.f32.mxu0 0.0
    %695 = vmatmul.mubr.f32.gmra.mxu0 %v628
    %v696 = vpop.f32.mrf.mxu0
    %v697 = vadd.f32 %v626, %v696
    %v698 = vpop.f32.mrf.mxu0
    %v699 = vadd.f32 %v626, %v698
    %700 = vdwg.mxu0
    %701 = vmatprep.subr.mxu0 0.0
    %702 = vmatpush1.msra.mxu0 0.0
    %703 = vmatprep.subr.mxu0 0.0
    %704 = vmatpush1.msra.mxu0 0.0
    %705 = vmatprep.subr.mxu0 0.0
    %706 = vmatpush1.msra.mxu0 0.0
    %707 = vmatprep.subr.mxu0 0.0
    %708 = vmatpush1.msra.mxu0 0.0
    %709 = vmatprep.subr.mxu0 0.0
    %710 = vmatpush1.msra.mxu0 0.0
    %711 = vmatprep.subr.mxu0 0.0
    %712 = vmatpush1.msra.mxu0 0.0
    %713 = vmatprep.subr.mxu0 0.0
    %714 = vmatpush1.msra.mxu0 0.0
    %715 = vmatprep.subr.mxu0 0.0
    %716 = vmatpush1.msra.mxu0 0.0
    %717 = vmatprep.subr.mxu0 0.0
    %718 = vmatpush1.msra.mxu0 0.0
    %719 = vmatprep.subr.mxu0 0.0
    %720 = vmatpush1.msra.mxu0 0.0
    %721 = vmatprep.subr.mxu0 0.0
    %722 = vmatpush1.msra.mxu0 0.0
    %723 = vmatprep.subr.mxu0 0.0
    %724 = vmatpush1.msra.mxu0 0.0
    %725 = vmatprep.subr.mxu0 %v615
    %726 = vmatpush1.msra.mxu0 %v614
    %727 = vmatprep.subr.mxu0 %v611
    %728 = vmatpush1.msra.mxu0 %v610
    %729 = vmatprep.subr.mxu0 %v607
    %730 = vmatpush1.msra.mxu0 %v606
    %731 = vmatprep.subr.mxu0 %v603
    %732 = vmatpush1.msra.mxu0 %v602
    %733 = vmatprep.subr.mxu0 0.0
    %734 = vmatpush2.msra.mxu0 0.0
    %735 = vmatprep.subr.mxu0 0.0
    %736 = vmatpush2.msra.mxu0 0.0
    %737 = vmatprep.subr.mxu0 0.0
    %738 = vmatpush2.msra.mxu0 0.0
    %739 = vmatprep.subr.mxu0 0.0
    %740 = vmatpush2.msra.mxu0 0.0
    %741 = vmatprep.subr.mxu0 0.0
    %742 = vmatpush2.msra.mxu0 0.0
    %743 = vmatprep.subr.mxu0 0.0
    %744 = vmatpush2.msra.mxu0 0.0
    %745 = vmatprep.subr.mxu0 0.0
    %746 = vmatpush2.msra.mxu0 0.0
    %747 = vmatprep.subr.mxu0 0.0
    %748 = vmatpush2.msra.mxu0 0.0
    %749 = vmatprep.subr.mxu0 0.0
    %750 = vmatpush2.msra.mxu0 0.0
    %751 = vmatprep.subr.mxu0 0.0
    %752 = vmatpush2.msra.mxu0 0.0
    %753 = vmatprep.subr.mxu0 0.0
    %754 = vmatpush2.msra.mxu0 0.0
    %755 = vmatprep.subr.mxu0 0.0
    %756 = vmatpush2.msra.mxu0 0.0
    %757 = vmatprep.subr.mxu0 0.0
    %758 = vmatpush2.msra.mxu0 0.0
    %759 = vmatprep.subr.mxu0 0.0
    %760 = vmatpush2.msra.mxu0 0.0
    %761 = vmatprep.subr.mxu0 0.0
    %762 = vmatpush2.msra.mxu0 0.0
    %763 = vmatprep.subr.mxu0 0.0
    %764 = vmatpush2.msra.mxu0 0.0
    %765 = vmatprep.mubr.f32.mxu0 0.0
    %766 = vmatmul.mubr.f32.gmra.mxu0 %v628
    %v767 = vpop.f32.mrf.mxu0
    %v768 = vadd.f32 %v626, %v767
    %v769 = vpop.f32.mrf.mxu0
    %v770 = vadd.f32 %v626, %v769
    %771 = vdwg.mxu0
    %v772 = vmul.f32 %v697, 0.5
    %v773 = vmul.f32 %v699, 0.5
    %v774 = vmul.f32 %v768, 0.5
    %v775 = vmul.f32 %v770, 0.5
    %v776 = vtanh.pop %v772
    %v777 = vtanh.pop %v773
    %v778 = vtanh.pop %v774
    %v779 = vtanh.pop %v775
    %v780 = vmul.f32 %v776, 0.5
    %v781 = vmul.f32 %v777, 0.5
    %v782 = vmul.f32 %v778, 0.5
    %v783 = vmul.f32 %v779, 0.5
    %v784 = vadd.f32 %v780, 0.5
    %v785 = vadd.f32 %v781, 0.5
    %v786 = vadd.f32 %v782, 0.5
    %v787 = vadd.f32 %v783, 0.5
    %v788 = vsub.f32 1.0, %v784
    %v789 = vsub.f32 1.0, %v785
    %v790 = vsub.f32 1.0, %v786
    %v791 = vsub.f32 1.0, %v787
    %v792 = vsel %vm83, %v784, %v788
    %v793 = vsel %vm84, %v785, %v789
    %v794 = vsel %vm85, %v786, %v790
    %v795 = vsel %vm86, %v787, %v791
    %v800 = vcombine.low %v792, %v793
    %v801 = vcombine.low %v794, %v795
    %v803 = vunpack.c.l.s4 1966171168
    %v804 = vunpack.c.0.s8 %v803
    %v805 = vlaneseq
    %v806 = vshrl.u32 %v805, 7
    %v807 = vsub.s32 %v804, %v806
    %v808 = vrot.slane %v800, %v807
    %v810 = vunpack.c.l.s4 1966171168
    %v811 = vunpack.c.0.s8 %v810
    %v812 = vlaneseq
    %v813 = vshrl.u32 %v812, 7
    %v814 = vsub.s32 %v811, %v813
    %v815 = vrot.slane %v801, %v814
    %v816 = vcombine.low %v808, %v815
    %v818 = vunpack.c.l.s4 1966171168
    %v819 = vunpack.c.0.s8 %v818
    %v820 = vlaneseq
    %v821 = vshrl.u32 %v820, 7
    %v822 = vsub.s32 %v819, %v821
    %v823 = vrot.slane %v816, %v822
    %v825 = vlaneseq
    %vm826 = vcmp.ge.s32.totalorder %v825, 0
    %vm827 = vcmp.lt.s32.totalorder %v825, 400
    %vm828 = vmand %vm826, %vm827
    %829 = vst.msk [vmem:[#allocation3] sm:$0xf] %vm828, %v823
    // Predicated region
    $region30: #{tpu_custom_call.1} parent=1 // pred_check
      _
    $region31: #{tpu_custom_call.1} parent=1 // pred_check_branch
      %831 = sbr.rel (0) target = $region33
    $region32: #{tpu_custom_call.1} parent=1 // pred_region
      %s833 = ssub.s32 64, 64
      %834 = vsyncadd [#allocation4], %s833
      %s836 = sshll.u32 [#allocation3], 4
      %s837 = int_to_ptr.vmem [resolvable:$true] %s836
      %839 = dma.vmem_to_hbm [thread:$0]  %s837, 64, %s7, [#allocation4]
    $region33: #{tpu_custom_call.1} parent=1 // pred_fallthru
      _
    // Predicated region
    $region34: #{tpu_custom_call.1} parent=1 // pred_check
      _
    $region35: #{tpu_custom_call.1} parent=1 // pred_check_branch
      %841 = sbr.rel (0) target = $region37
    $region36: #{tpu_custom_call.1} parent=1 // pred_region
      %842 = dma.done [#allocation4], 64
    $region37: #{tpu_custom_call.1} parent=1 // pred_fallthru
      _
    %843 = vsyncpa [#allocation4], 1

</llo_original>
